<compile_context>
chip_gen: v5e
topology: v5e:2x2
jax: 0.10.0
libtpu: 0.0.40
codegen_flags: <defaults>
</compile_context>

<pallas_src>
import jax
import jax.numpy as jnp
from jax import lax
from jax.experimental import pallas as pl
from jax.experimental.pallas import tpu as pltpu


def _pick_chunk(n, target, multiple=1):
    """Largest divisor of n that is <= target and a multiple of `multiple`
    (falling back to n itself, which is always a legal full-extent block)."""
    for cand in range(min(target, n), 0, -1):
        if n % cand == 0 and (cand % multiple == 0 or cand == n):
            return cand
    return n


# ---------------------------------------------------------------------------
# Kernel 1: hoisted sequence-level input projection (tiled over M, 'parallel')
#   gi = x @ W_ih_cat + b_proj     x: [tile_m, H] bf16, W: [H, 3H] bf16,
#                                  b: [1, 3H] f32  -> out bf16 [tile_m, 3H]
# ---------------------------------------------------------------------------
def _input_proj_kernel(x_ref, w_ref, b_ref, o_ref):
    o_ref[...] = (
        jnp.dot(x_ref[...], w_ref[...], preferred_element_type=jnp.float32)
        + b_ref[...]
    ).astype(o_ref.dtype)


def input_proj_pallas(x, w_ih_cat, b_proj, *, out_dtype=jnp.bfloat16,
                      tile_m_target=512):
    M, H = x.shape
    H3 = w_ih_cat.shape[1]
    tile_m = _pick_chunk(M, tile_m_target, 8)
    return pl.pallas_call(
        _input_proj_kernel,
        grid=(M // tile_m,),
        in_specs=[
            pl.BlockSpec((tile_m, H), lambda i: (i, 0)),
            pl.BlockSpec((H, H3), lambda i: (0, 0)),     # W resident in VMEM
            pl.BlockSpec((1, H3), lambda i: (0, 0)),     # bias resident
        ],
        out_specs=pl.BlockSpec((tile_m, H3), lambda i: (i, 0)),
        out_shape=jax.ShapeDtypeStruct((M, H3), out_dtype),
        compiler_params=pltpu.CompilerParams(
            dimension_semantics=("parallel",),
            vmem_limit_bytes=64 * 1024 * 1024),
    )(x, w_ih_cat, b_proj)


# ---------------------------------------------------------------------------
# Kernel 2: GRU recurrence, time axis chunked on the grid.
#   Each grid step processes TC timesteps with an unrolled inner loop:
#     gh = h @ W_hh_cat (bf16 MXU, f32 acc);  gates from gi[t] + gh;  h <- h'
#   W_hh / b_hn / h0 are grid-invariant -> loaded to VMEM once, kept resident.
#   h is carried across chunks in a VMEM f32 scratch accumulator.
# ---------------------------------------------------------------------------
def _gru_recurrence_kernel(gi_ref, h0_ref, whh_ref, bhn_ref, out_ref, h_scratch):
    c = pl.program_id(0)
    tc = gi_ref.shape[0]
    H = h_scratch.shape[-1]

    @pl.when(c == 0)
    def _():
        h_scratch[...] = h0_ref[...].astype(jnp.float32)

    whh = whh_ref[...]            # [H, 3H] bf16, resident
    bhn = bhn_ref[...]            # [1, H]  f32,  resident

    def step(s, h):
        gi = gi_ref[s].astype(jnp.float32)                       # [B, 3H]
        gh = jnp.dot(h.astype(whh.dtype), whh,
                     preferred_element_type=jnp.float32)         # [B, 3H]
        r = jax.nn.sigmoid(gi[:, 0:H] + gh[:, 0:H])
        z = jax.nn.sigmoid(gi[:, H:2 * H] + gh[:, H:2 * H])
        n = jnp.tanh(gi[:, 2 * H:] + r * (gh[:, 2 * H:] + bhn))
        h_new = n + z * (h - n)                                  # == (1-z)n + zh
        out_ref[s] = h_new.astype(out_ref.dtype)
        return h_new

    # Short fixed trip-count -> fully unrolled for LLO scheduler visibility.
    h_scratch[...] = lax.fori_loop(0, tc, step, h_scratch[...], unroll=True)


def gru_recurrence_pallas(gi_seq, h0, w_hh_cat, b_hn, *,
                          out_dtype=jnp.bfloat16, t_chunk_target=16):
    T, B, H3 = gi_seq.shape
    H = h0.shape[-1]
    tc = _pick_chunk(T, t_chunk_target, 1)
    # NOTE: for very large H on v7x (64 MiB VMEM), add
    # pipeline_mode=pl.Buffered(1) on the grid-invariant W_hh spec to drop its
    # dead double buffer.  TODO(synk): add a leading 'parallel' batch-chunk
    # grid axis (per-chunk h scratch) so v7x's two TensorCores split B.
    return pl.pallas_call(
        _gru_recurrence_kernel,
        grid=(T // tc,),
        in_specs=[
            pl.BlockSpec((tc, B, H3), lambda c: (c, 0, 0)),   # gi chunk
            pl.BlockSpec((B, H), lambda c: (0, 0)),           # h0 (read at c==0)
            pl.BlockSpec((H, H3), lambda c: (0, 0)),          # W_hh resident
            pl.BlockSpec((1, H), lambda c: (0, 0)),           # b_hn resident
        ],
        out_specs=pl.BlockSpec((tc, B, H), lambda c: (c, 0, 0)),
        out_shape=jax.ShapeDtypeStruct((T, B, H), out_dtype),
        scratch_shapes=[pltpu.VMEM((B, H), jnp.float32)],     # f32 hidden carry
        compiler_params=pltpu.CompilerParams(
            dimension_semantics=("arbitrary",),               # sequential in time
            vmem_limit_bytes=64 * 1024 * 1024),
    )(gi_seq, h0, w_hh_cat, b_hn)


# ---------------------------------------------------------------------------
# Module wrapper
# ---------------------------------------------------------------------------
class EncoderRNNPallas:
    """JAX/Pallas port of:
        self.embedding = nn.Embedding(input_size, hidden_size)
        self.gru       = nn.GRU(hidden_size, hidden_size)
      forward(input, hidden):
        embedded = embedding(input)             -> [1, B, H]
        output, hidden = gru(embedded, hidden)  -> ([1, B, H], [1, B, H])
    forward_sequence() runs a whole [T, B] token sequence with the time loop
    chunked inside the Pallas recurrence kernel (weights resident in VMEM).
    """

    def __init__(self, input_size, hidden_size, key, param_dtype=jnp.bfloat16):
        # param_dtype=bf16: native-rate MXU matmuls, half the weight DMA and
        # half the gi/out streaming traffic.  Gate math / h carry stay f32.
        self.hidden_size = hidden_size
        H = hidden_size
        k_emb, k_wih, k_whh, k_bih, k_bhh = jax.random.split(key, 5)
        scale = 1.0 / jnp.sqrt(hidden_size)

        self.embedding = jax.random.normal(
            k_emb, (input_size, H), jnp.float32).astype(param_dtype)
        w_ih = jax.random.uniform(k_wih, (3, H, H), jnp.float32, -scale, scale)
        w_hh = jax.random.uniform(k_whh, (3, H, H), jnp.float32, -scale, scale)
        b_ih = jax.random.uniform(k_bih, (3, H), jnp.float32, -scale, scale)
        b_hh = jax.random.uniform(k_bhh, (3, H), jnp.float32, -scale, scale)

        # Fused, already-transposed layout so kernels compute x @ W: [H, 3H],
        # gate order (r, z, n) as in torch.nn.GRU.
        self.w_ih_cat = jnp.concatenate([w_ih[0], w_ih[1], w_ih[2]], 1).astype(param_dtype)
        self.w_hh_cat = jnp.concatenate([w_hh[0], w_hh[1], w_hh[2]], 1).astype(param_dtype)
        # r/z biases pre-summed into the hoisted input projection; only the
        # n-gate hidden bias must stay inside the recurrence (r * (hW_hn + b_hn)).
        self.b_proj = jnp.concatenate(
            [b_ih[0] + b_hh[0], b_ih[1] + b_hh[1], b_ih[2]], 0)[None, :]   # [1, 3H] f32
        self.b_hn = b_hh[2][None, :]                                       # [1, H]  f32
        # Originals kept only for the pure-JAX reference check.
        self._b_ih, self._b_hh = b_ih, b_hh

    def init_hidden(self, batch):
        return jnp.zeros((1, batch, self.hidden_size), jnp.float32)

    def forward_sequence(self, token_seq, hidden):
        """token_seq: int32 [T, B]; hidden: f32 [1, B, H]
           -> (out_seq [T, B, H] bf16, hidden_T [1, B, H] bf16)."""
        T, B = token_seq.shape
        H = self.hidden_size
        # TODO(synk): the embedding row-gather stays as one sequence-level XLA
        # jnp.take (fusing the dynamic gather into the projection kernel needs
        # an in-kernel gather / pl.Element scalar-prefetch map); table and emb
        # are bf16 so the extra HBM round trip is already halved.
        emb = jnp.take(self.embedding, token_seq.reshape(-1), axis=0)      # [T*B, H] bf16
        # Phase 1: one big M-tiled input projection for the whole sequence.
        gi_seq = input_proj_pallas(emb, self.w_ih_cat, self.b_proj)        # [T*B, 3H] bf16
        gi_seq = gi_seq.reshape(T, B, 3 * H)
        # Phase 2: sequential recurrence, time axis chunked inside the kernel.
        out_seq = gru_recurrence_pallas(gi_seq, hidden[0], self.w_hh_cat, self.b_hn)
        # Single-layer GRU: final hidden == last output row (no duplicate store).
        return out_seq, out_seq[-1:]

    def forward(self, tokens, hidden):
        """Original module signature: one token step.
        tokens: int32 [B]; hidden: f32 [1, B, H] -> ([1, B, H], [1, B, H])."""
        out_seq, h_new = self.forward_sequence(tokens[None, :], hidden)
        return out_seq, h_new


# ---------------------------------------------------------------------------
# Pure-JAX f32 reference (PyTorch GRU math), for correctness checking.
# ---------------------------------------------------------------------------
def _gru_reference_seq(emb_seq, h0, w_ih_cat, w_hh_cat, b_ih, b_hh):
    H = h0.shape[-1]
    bi = jnp.concatenate([b_ih[0], b_ih[1], b_ih[2]])[None, :]
    bh = jnp.concatenate([b_hh[0], b_hh[1], b_hh[2]])[None, :]
    h = h0
    outs = []
    for t in range(emb_seq.shape[0]):
        gi = emb_seq[t] @ w_ih_cat + bi
        gh = h @ w_hh_cat + bh
        r = jax.nn.sigmoid(gi[:, :H] + gh[:, :H])
        z = jax.nn.sigmoid(gi[:, H:2 * H] + gh[:, H:2 * H])
        n = jnp.tanh(gi[:, 2 * H:] + r * gh[:, 2 * H:])
        h = (1.0 - z) * n + z * h
        outs.append(h)
    return jnp.stack(outs), h


if __name__ == "__main__":
    # Hardware-aligned small shapes: B multiple of 8 (sublane), H multiple of 128 (lane).
    VOCAB, HIDDEN, BATCH, SEQ = 32, 128, 8, 8
    key = jax.random.PRNGKey(0)
    k_model, k_tok, k_hid = jax.random.split(key, 3)

    enc = EncoderRNNPallas(VOCAB, HIDDEN, k_model)
    token_seq = jax.random.randint(k_tok, (SEQ, BATCH), 0, VOCAB, dtype=jnp.int32)
    hidden0 = jax.random.normal(k_hid, (1, BATCH, HIDDEN), jnp.float32)

    # Full-sequence encode (time loop chunked inside the kernel).
    out_seq, hidden_T = enc.forward_sequence(token_seq, hidden0)
    out_seq = jax.block_until_ready(out_seq)
    hidden_T = jax.block_until_ready(hidden_T)

    # Single-step forward (original module signature).
    out1, hid1 = enc.forward(token_seq[0], hidden0)
    out1 = jax.block_until_ready(out1)
    hid1 = jax.block_until_ready(hid1)

    # Correctness vs pure-JAX f32 reference (same bf16-quantized params cast to f32).
    emb_seq = jnp.take(enc.embedding, token_seq.reshape(-1), axis=0).astype(
        jnp.float32).reshape(SEQ, BATCH, HIDDEN)
    ref_seq, ref_h = _gru_reference_seq(
        emb_seq, hidden0[0],
        enc.w_ih_cat.astype(jnp.float32), enc.w_hh_cat.astype(jnp.float32),
        enc._b_ih, enc._b_hh)

    assert out_seq.shape == (SEQ, BATCH, HIDDEN)
    assert hidden_T.shape == (1, BATCH, HIDDEN)
    assert out1.shape == (1, BATCH, HIDDEN) and hid1.shape == (1, BATCH, HIDDEN)
    # bf16 storage of gi/out and bf16 matmul operands (f32 accumulate/carry)
    # -> loosened tolerances vs the f32 reference.
    TOL = 5e-2
    assert jnp.allclose(out_seq.astype(jnp.float32), ref_seq, atol=TOL, rtol=TOL)
    assert jnp.allclose(hidden_T[0].astype(jnp.float32), ref_h, atol=TOL, rtol=TOL)
    assert jnp.allclose(out1[0].astype(jnp.float32), ref_seq[0], atol=TOL, rtol=TOL)
    assert jnp.allclose(hid1[0].astype(jnp.float32), ref_seq[0], atol=TOL, rtol=TOL)

    print("KERNEL_OK")
</pallas_src>

<mosaic_0001>
module attributes {stable_mosaic.version = 11 : i64} {
  func.func @_input_proj_kernel(%arg0: i32, %arg1: memref<64x128xbf16, #tpu.memory_space<vmem>>, %arg2: memref<128x384xbf16, #tpu.memory_space<vmem>>, %arg3: memref<1x384xf32, #tpu.memory_space<vmem>>, %arg4: memref<64x384xbf16, #tpu.memory_space<vmem>>) attributes {dimension_semantics = [#tpu.dimension_semantics<parallel>], iteration_bounds = array<i64: 1>, scalar_prefetch = 0 : i64, scratch_operands = 0 : i64, tpu.core_type = #tpu.core_type<tc>, window_params = [{transform_indices = @transform_0, window_bounds = array<i64: 64, 128>}, {pipeline_mode = #tpu.pipeline_mode<synchronous>, transform_indices = @transform_1, window_bounds = array<i64: 128, 384>}, {pipeline_mode = #tpu.pipeline_mode<synchronous>, transform_indices = @transform_2, window_bounds = array<i64: 1, 384>}, {transform_indices = @transform_3, window_bounds = array<i64: 64, 384>}]} {
    %c0 = arith.constant 0 : index
    %c0_0 = arith.constant 0 : index
    %0 = vector.load %arg1[%c0, %c0_0] : memref<64x128xbf16, #tpu.memory_space<vmem>>, vector<64x128xbf16>
    %c0_1 = arith.constant 0 : index
    %c0_2 = arith.constant 0 : index
    %1 = vector.load %arg2[%c0_1, %c0_2] : memref<128x384xbf16, #tpu.memory_space<vmem>>, vector<128x384xbf16>
    %cst = arith.constant dense<0.000000e+00> : vector<64x384xf32>
    %2 = tpu.matmul %0, %1, %cst {dimension_numbers = #tpu.dot_dimension_numbers<[1], [0], [0], [1], [0, 0, 1, 1], [], []>} : vector<64x128xbf16>, vector<128x384xbf16>, vector<64x384xf32> -> vector<64x384xf32>
    %c0_3 = arith.constant 0 : index
    %c0_4 = arith.constant 0 : index
    %3 = vector.load %arg3[%c0_3, %c0_4] : memref<1x384xf32, #tpu.memory_space<vmem>>, vector<1x384xf32>
    %4 = vector.broadcast %3 : vector<1x384xf32> to vector<64x384xf32>
    %5 = arith.addf %2, %4 : vector<64x384xf32>
    %6 = arith.truncf %5 : vector<64x384xf32> to vector<64x384xbf16>
    %c0_5 = arith.constant 0 : index
    %c0_6 = arith.constant 0 : index
    %7 = vector.load %arg4[%c0_5, %c0_6] : memref<64x384xbf16, #tpu.memory_space<vmem>>, vector<64x384xbf16>
    tpu.vector_store %arg4[%c0_5, %c0_6], %6 {strides = array<i32>} : memref<64x384xbf16, #tpu.memory_space<vmem>>, vector<64x384xbf16>,
    return
  }
  func.func @transform_0(%arg0: i32) -> (i32, i32) {
    %c0_i32 = arith.constant 0 : i32
    %c0_i32_0 = arith.constant 0 : i32
    return %arg0, %c0_i32 : i32, i32
  }
  func.func @transform_1(%arg0: i32) -> (i32, i32) {
    %c0_i32 = arith.constant 0 : i32
    %c0_i32_0 = arith.constant 0 : i32
    %c0_i32_1 = arith.constant 0 : i32
    return %c0_i32, %c0_i32_0 : i32, i32
  }
  func.func @transform_2(%arg0: i32) -> (i32, i32) {
    %c0_i32 = arith.constant 0 : i32
    %c0_i32_0 = arith.constant 0 : i32
    %c0_i32_1 = arith.constant 0 : i32
    return %c0_i32, %c0_i32_0 : i32, i32
  }
  func.func @transform_3(%arg0: i32) -> (i32, i32) {
    %c0_i32 = arith.constant 0 : i32
    %c0_i32_0 = arith.constant 0 : i32
    return %arg0, %c0_i32 : i32, i32
  }
}

</mosaic_0001>

<llo_original>
// kernel: tpu_custom_call.1
$region0: #{tpu_custom_call.1}
  #allocation0 [shape = 'u32[]', space=smem, size = 0x4, offset = 0x4, fixed_abs, tag = 'smem constant byte address 0x4 - core index']
  #allocation1 [shape = 'u32[72,128]{1,0:T(1,128)}', space=vmem, size = 0x9000, scoped, tag = 'internal scratch']
  %s0 = inlined_call_operand.hbm [shape: bf16[64,128], index: 0, kind: input, shape index: {}]
  %s1 = inlined_call_operand.hbm [shape: bf16[128,384], index: 1, kind: input, shape index: {}]
  %s2 = inlined_call_operand.hbm [shape: f32[1,384], index: 2, kind: input, shape index: {}]
  %s3 = inlined_call_operand.hbm [shape: bf16[64,384], index: 3, kind: output, shape index: {}]
  %s4 = sld [smem:[#allocation0]]
  $region34: #{tpu_custom_call.1} parent=0
    _
  %s6 = ssub.s32 1, %s4
  %s7 = scalar_select 0, %s6, %s4
  $region1: #{tpu_custom_call.1} parent=0
    #allocation2 [shape = 'u8[16384]{0}', space=vmem, size = 0x4000, scoped, tag = 'input window, operand 0, single buffered']
    #allocation3 [shape = 's32[1]{0}', space=sflag, size = 0x4, scoped, tag = 'scoped memory for tpu_custom_call.1']
    #allocation4 [shape = 's32[1]{0}', space=sflag, size = 0x4, scoped, tag = 'scoped memory for tpu_custom_call.1']
    #allocation5 [shape = 'u8[98304]{0}', space=vmem, size = 0x18000, scoped, tag = 'input window, operand 1, single buffered']
    #allocation6 [shape = 's32[1]{0}', space=sflag, size = 0x4, scoped, tag = 'scoped memory for tpu_custom_call.1']
    #allocation7 [shape = 'u8[1536]{0}', space=vmem, size = 0x800, scoped, tag = 'input window, operand 2, single buffered']
    #allocation8 [shape = 'u8[49152]{0}', space=vmem, size = 0xc000, scoped, tag = 'output window, operand 0, single buffered']
    %8 = vsyncpa [#allocation3], 0
    %9 = vsyncpa [#allocation6], 0
    %10 = vsyncpa [#allocation4], 0
    // Predicated region
    $region2: #{tpu_custom_call.1} parent=1 // pred_check
      _
    $region3: #{tpu_custom_call.1} parent=1 // pred_check_branch
      %12 = sbr.rel (0) target = $region5
    $region4: #{tpu_custom_call.1} parent=1 // pred_region
      %14 = vsyncadd [#allocation3], 0
      %s15 = sshll.u32 %s0, 4
      %s16 = int_to_ptr.hbm [resolvable:$true] %s15
      %s17 = sshll.u32 [#allocation2], 4
      %s18 = int_to_ptr.vmem [resolvable:$true] %s17
      %23 = dma.hbm_to_vmem [thread:$0]  %s16, 512, %s18, [#allocation3], 64, 64, 4
    $region5: #{tpu_custom_call.1} parent=1 // pred_fallthru
      _
    // Predicated region
    $region6: #{tpu_custom_call.1} parent=1 // pred_check
      _
    $region7: #{tpu_custom_call.1} parent=1 // pred_check_branch
      %25 = sbr.rel (0) target = $region9
    $region8: #{tpu_custom_call.1} parent=1 // pred_region
      %27 = vsyncadd [#allocation6], 0
      %s28 = sshll.u32 %s1, 4
      %s29 = int_to_ptr.hbm [resolvable:$true] %s28
      %s30 = sshll.u32 [#allocation5], 4
      %s31 = int_to_ptr.vmem [resolvable:$true] %s30
      %36 = dma.hbm_to_vmem [thread:$0]  %s29, 3072, %s31, [#allocation6], 192, 192, 12
    $region9: #{tpu_custom_call.1} parent=1 // pred_fallthru
      _
    // Predicated region
    $region10: #{tpu_custom_call.1} parent=1 // pred_check
      _
    $region11: #{tpu_custom_call.1} parent=1 // pred_check_branch
      %38 = sbr.rel (0) target = $region13
    $region12: #{tpu_custom_call.1} parent=1 // pred_region
      %40 = vsyncadd [#allocation6], 0
      %s42 = sshll.u32 %s2, 4
      %s43 = int_to_ptr.hbm [resolvable:$true] %s42
      %s44 = sshll.u32 [#allocation7], 4
      %s45 = int_to_ptr.vmem [resolvable:$true] %s44
      %47 = dma.hbm_to_vmem [thread:$0]  %s43, 48, %s45, [#allocation6]
    $region13: #{tpu_custom_call.1} parent=1 // pred_fallthru
      _
    // Predicated region
    $region14: #{tpu_custom_call.1} parent=1 // pred_check
      _
    $region15: #{tpu_custom_call.1} parent=1 // pred_check_branch
      %49 = sbr.rel (0) target = $region17
    $region16: #{tpu_custom_call.1} parent=1 // pred_region
      %51 = dma.done [#allocation3], 512
    $region17: #{tpu_custom_call.1} parent=1 // pred_fallthru
      _
    // Predicated region
    $region18: #{tpu_custom_call.1} parent=1 // pred_check
      _
    $region19: #{tpu_custom_call.1} parent=1 // pred_check_branch
      %53 = sbr.rel (0) target = $region21
    $region20: #{tpu_custom_call.1} parent=1 // pred_region
      %55 = dma.done [#allocation6], 3072
    $region21: #{tpu_custom_call.1} parent=1 // pred_fallthru
      _
    // Predicated region
    $region22: #{tpu_custom_call.1} parent=1 // pred_check
      _
    $region23: #{tpu_custom_call.1} parent=1 // pred_check_branch
      %57 = sbr.rel (0) target = $region25
    $region24: #{tpu_custom_call.1} parent=1 // pred_region
      %59 = dma.done [#allocation6], 48
    $region25: #{tpu_custom_call.1} parent=1 // pred_fallthru
      _
    %v60 = vld [vmem:[#allocation2] sm:$0xf]
    %v61 = vld [vmem:[#allocation2 + $0x4] sm:$0xf]
    %v62 = vld [vmem:[#allocation2 + $0x8] sm:$0xf]
    %v63 = vld [vmem:[#allocation2 + $0xc] sm:$0xf]
    %v64 = vld [vmem:[#allocation2 + $0x10] sm:$0xf]
    %v65 = vld [vmem:[#allocation2 + $0x14] sm:$0xf]
    %v66 = vld [vmem:[#allocation2 + $0x18] sm:$0xf]
    %v67 = vld [vmem:[#allocation2 + $0x1c] sm:$0xf]
    %v68 = vld [vmem:[#allocation5] sm:$0xff]
    %v69 = vld [vmem:[#allocation5 + $0x8] sm:$0xf]
    %v70 = vld [vmem:[#allocation5 + $0xc] sm:$0xff]
    %v71 = vld [vmem:[#allocation5 + $0x14] sm:$0xf]
    %v72 = vld [vmem:[#allocation5 + $0x18] sm:$0xff]
    %v73 = vld [vmem:[#allocation5 + $0x20] sm:$0xf]
    %v74 = vld [vmem:[#allocation5 + $0x24] sm:$0xff]
    %v75 = vld [vmem:[#allocation5 + $0x2c] sm:$0xf]
    %v76 = vld [vmem:[#allocation5 + $0x30] sm:$0xff]
    %v77 = vld [vmem:[#allocation5 + $0x38] sm:$0xf]
    %v78 = vld [vmem:[#allocation5 + $0x3c] sm:$0xff]
    %v79 = vld [vmem:[#allocation5 + $0x44] sm:$0xf]
    %v80 = vld [vmem:[#allocation5 + $0x48] sm:$0xff]
    %v81 = vld [vmem:[#allocation5 + $0x50] sm:$0xf]
    %v82 = vld [vmem:[#allocation5 + $0x54] sm:$0xff]
    %v83 = vld [vmem:[#allocation5 + $0x5c] sm:$0xf]
    %v84 = vld [vmem:[#allocation5 + $0x60] sm:$0xff]
    %v85 = vld [vmem:[#allocation5 + $0x68] sm:$0xf]
    %v86 = vld [vmem:[#allocation5 + $0x6c] sm:$0xff]
    %v87 = vld [vmem:[#allocation5 + $0x74] sm:$0xf]
    %v88 = vld [vmem:[#allocation5 + $0x78] sm:$0xff]
    %v89 = vld [vmem:[#allocation5 + $0x80] sm:$0xf]
    %v90 = vld [vmem:[#allocation5 + $0x84] sm:$0xff]
    %v91 = vld [vmem:[#allocation5 + $0x8c] sm:$0xf]
    %v92 = vld [vmem:[#allocation5 + $0x90] sm:$0xff]
    %v93 = vld [vmem:[#allocation5 + $0x98] sm:$0xf]
    %v94 = vld [vmem:[#allocation5 + $0x9c] sm:$0xff]
    %v95 = vld [vmem:[#allocation5 + $0xa4] sm:$0xf]
    %v96 = vld [vmem:[#allocation5 + $0xa8] sm:$0xff]
    %v97 = vld [vmem:[#allocation5 + $0xb0] sm:$0xf]
    %v98 = vld [vmem:[#allocation5 + $0xb4] sm:$0xff]
    %v99 = vld [vmem:[#allocation5 + $0xbc] sm:$0xf]
    %v100 = vld [vmem:[#allocation7] sm:$0x7]
    %v102 = vperm.slane %v100, 0
    %v103 = vperm.slane %v100, 1
    %v104 = vperm.slane %v100, 2
    %v116 = vunpack.c.l.b16 %v60
    %v117 = vunpack.c.l.b16 %v61
    %v118 = vunpack.c.l.b16 %v62
    %v119 = vunpack.c.l.b16 %v63
    %v120 = vunpack.c.l.b16 %v64
    %v121 = vunpack.c.l.b16 %v65
    %v122 = vunpack.c.l.b16 %v66
    %v123 = vunpack.c.l.b16 %v67
    %v124 = vpack.c.b16 %v117, %v116
    %v125 = vpack.c.b16 %v119, %v118
    %v126 = vpack.c.b16 %v121, %v120
    %v127 = vpack.c.b16 %v123, %v122
    %v164 = vunpack.c.l.b16 %v68
    %v165 = vunpack.c.h.b16 %v68
    %v166 = vunpack.c.l.b16 %v69
    %v167 = vunpack.c.l.b16 %v70
    %v168 = vunpack.c.h.b16 %v70
    %v169 = vunpack.c.l.b16 %v71
    %v170 = vunpack.c.l.b16 %v72
    %v171 = vunpack.c.h.b16 %v72
    %v172 = vunpack.c.l.b16 %v73
    %v173 = vunpack.c.l.b16 %v74
    %v174 = vunpack.c.h.b16 %v74
    %v175 = vunpack.c.l.b16 %v75
    %v176 = vunpack.c.l.b16 %v76
    %v177 = vunpack.c.h.b16 %v76
    %v178 = vunpack.c.l.b16 %v77
    %v179 = vunpack.c.l.b16 %v78
    %v180 = vunpack.c.h.b16 %v78
    %v181 = vunpack.c.l.b16 %v79
    %v182 = vunpack.c.l.b16 %v80
    %v183 = vunpack.c.h.b16 %v80
    %v184 = vunpack.c.l.b16 %v81
    %v185 = vunpack.c.l.b16 %v82
    %v186 = vunpack.c.h.b16 %v82
    %v187 = vunpack.c.l.b16 %v83
    %v188 = vunpack.c.l.b16 %v84
    %v189 = vunpack.c.h.b16 %v84
    %v190 = vunpack.c.l.b16 %v85
    %v191 = vunpack.c.l.b16 %v86
    %v192 = vunpack.c.h.b16 %v86
    %v193 = vunpack.c.l.b16 %v87
    %v194 = vunpack.c.l.b16 %v88
    %v195 = vunpack.c.h.b16 %v88
    %v196 = vunpack.c.l.b16 %v89
    %v197 = vunpack.c.l.b16 %v90
    %v198 = vunpack.c.h.b16 %v90
    %v199 = vunpack.c.l.b16 %v91
    %v200 = vunpack.c.l.b16 %v92
    %v201 = vunpack.c.h.b16 %v92
    %v202 = vunpack.c.l.b16 %v93
    %v203 = vunpack.c.l.b16 %v94
    %v204 = vunpack.c.h.b16 %v94
    %v205 = vunpack.c.l.b16 %v95
    %v206 = vunpack.c.l.b16 %v96
    %v207 = vunpack.c.h.b16 %v96
    %v208 = vunpack.c.l.b16 %v97
    %v209 = vunpack.c.l.b16 %v98
    %v210 = vunpack.c.h.b16 %v98
    %v211 = vunpack.c.l.b16 %v99
    %v212 = vpack.c.b16 %v167, %v164
    %v213 = vpack.c.b16 %v168, %v165
    %v214 = vpack.c.b16 %v169, %v166
    %v215 = vpack.c.b16 %v173, %v170
    %v216 = vpack.c.b16 %v174, %v171
    %v217 = vpack.c.b16 %v175, %v172
    %v218 = vpack.c.b16 %v179, %v176
    %v219 = vpack.c.b16 %v180, %v177
    %v220 = vpack.c.b16 %v181, %v178
    %v221 = vpack.c.b16 %v185, %v182
    %v222 = vpack.c.b16 %v186, %v183
    %v223 = vpack.c.b16 %v187, %v184
    %v224 = vpack.c.b16 %v191, %v188
    %v225 = vpack.c.b16 %v192, %v189
    %v226 = vpack.c.b16 %v193, %v190
    %v227 = vpack.c.b16 %v197, %v194
    %v228 = vpack.c.b16 %v198, %v195
    %v229 = vpack.c.b16 %v199, %v196
    %v230 = vpack.c.b16 %v203, %v200
    %v231 = vpack.c.b16 %v204, %v201
    %v232 = vpack.c.b16 %v205, %v202
    %v233 = vpack.c.b16 %v209, %v206
    %v234 = vpack.c.b16 %v210, %v207
    %v235 = vpack.c.b16 %v211, %v208
    %260 = vmatpush.bf16.msra.mxu0 %v233
    %261 = vmatpush.bf16.msra.mxu0 %v230
    %262 = vmatpush.bf16.msra.mxu0 %v227
    %263 = vmatpush.bf16.msra.mxu0 %v224
    %264 = vmatpush.bf16.msra.mxu0 %v221
    %265 = vmatpush.bf16.msra.mxu0 %v218
    %266 = vmatpush.bf16.msra.mxu0 %v215
    %267 = vmatpush.bf16.msra.mxu0 %v212
    %268 = vmatmul.bf16.gmra.mxu0 %v124
    %v269 = vpop.f32.mrf.mxu0
    %v270 = vadd.f32 %v102, %v269
    %v271 = vpop.f32.mrf.mxu0
    %v272 = vadd.f32 %v102, %v271
    %273 = vmatmul.bf16.gmra.mxu0 %v125
    %v274 = vpop.f32.mrf.mxu0
    %v275 = vadd.f32 %v102, %v274
    %v276 = vpop.f32.mrf.mxu0
    %v277 = vadd.f32 %v102, %v276
    %278 = vmatmul.bf16.gmra.mxu0 %v126
    %v279 = vpop.f32.mrf.mxu0
    %v280 = vadd.f32 %v102, %v279
    %v281 = vpop.f32.mrf.mxu0
    %v282 = vadd.f32 %v102, %v281
    %283 = vmatmul.bf16.gmra.mxu0 %v127
    %v284 = vpop.f32.mrf.mxu0
    %v285 = vadd.f32 %v102, %v284
    %v286 = vpop.f32.mrf.mxu0
    %v287 = vadd.f32 %v102, %v286
    %288 = vdwg.mxu0
    %289 = vmatpush.bf16.msra.mxu0 %v234
    %290 = vmatpush.bf16.msra.mxu0 %v231
    %291 = vmatpush.bf16.msra.mxu0 %v228
    %292 = vmatpush.bf16.msra.mxu0 %v225
    %293 = vmatpush.bf16.msra.mxu0 %v222
    %294 = vmatpush.bf16.msra.mxu0 %v219
    %295 = vmatpush.bf16.msra.mxu0 %v216
    %296 = vmatpush.bf16.msra.mxu0 %v213
    %297 = vmatmul.bf16.gmra.mxu0 %v124
    %v298 = vpop.f32.mrf.mxu0
    %v299 = vadd.f32 %v103, %v298
    %v300 = vpop.f32.mrf.mxu0
    %v301 = vadd.f32 %v103, %v300
    %302 = vmatmul.bf16.gmra.mxu0 %v125
    %v303 = vpop.f32.mrf.mxu0
    %v304 = vadd.f32 %v103, %v303
    %v305 = vpop.f32.mrf.mxu0
    %v306 = vadd.f32 %v103, %v305
    %307 = vmatmul.bf16.gmra.mxu0 %v126
    %v308 = vpop.f32.mrf.mxu0
    %v309 = vadd.f32 %v103, %v308
    %v310 = vpop.f32.mrf.mxu0
    %v311 = vadd.f32 %v103, %v310
    %312 = vmatmul.bf16.gmra.mxu0 %v127
    %v313 = vpop.f32.mrf.mxu0
    %v314 = vadd.f32 %v103, %v313
    %v315 = vpop.f32.mrf.mxu0
    %v316 = vadd.f32 %v103, %v315
    %317 = vdwg.mxu0
    %318 = vmatpush.bf16.msra.mxu0 %v235
    %319 = vmatpush.bf16.msra.mxu0 %v232
    %320 = vmatpush.bf16.msra.mxu0 %v229
    %321 = vmatpush.bf16.msra.mxu0 %v226
    %322 = vmatpush.bf16.msra.mxu0 %v223
    %323 = vmatpush.bf16.msra.mxu0 %v220
    %324 = vmatpush.bf16.msra.mxu0 %v217
    %325 = vmatpush.bf16.msra.mxu0 %v214
    %326 = vmatmul.bf16.gmra.mxu0 %v124
    %v327 = vpop.f32.mrf.mxu0
    %v328 = vadd.f32 %v104, %v327
    %v329 = vpop.f32.mrf.mxu0
    %v330 = vadd.f32 %v104, %v329
    %331 = vmatmul.bf16.gmra.mxu0 %v125
    %v332 = vpop.f32.mrf.mxu0
    %v333 = vadd.f32 %v104, %v332
    %v334 = vpop.f32.mrf.mxu0
    %v335 = vadd.f32 %v104, %v334
    %336 = vmatmul.bf16.gmra.mxu0 %v126
    %v337 = vpop.f32.mrf.mxu0
    %v338 = vadd.f32 %v104, %v337
    %v339 = vpop.f32.mrf.mxu0
    %v340 = vadd.f32 %v104, %v339
    %341 = vmatmul.bf16.gmra.mxu0 %v127
    %v342 = vpop.f32.mrf.mxu0
    %v343 = vadd.f32 %v104, %v342
    %v344 = vpop.f32.mrf.mxu0
    %v345 = vadd.f32 %v104, %v344
    %346 = vdwg.mxu0
    %v347 = vpack.c.bf16 %v299, %v270
    %v348 = vpack.c.bf16 %v328, %v328
    %v349 = vpack.c.bf16 %v301, %v272
    %v350 = vpack.c.bf16 %v330, %v330
    %v351 = vpack.c.bf16 %v304, %v275
    %v352 = vpack.c.bf16 %v333, %v333
    %v353 = vpack.c.bf16 %v306, %v277
    %v354 = vpack.c.bf16 %v335, %v335
    %v355 = vpack.c.bf16 %v309, %v280
    %v356 = vpack.c.bf16 %v338, %v338
    %v357 = vpack.c.bf16 %v311, %v282
    %v358 = vpack.c.bf16 %v340, %v340
    %v359 = vpack.c.bf16 %v314, %v285
    %v360 = vpack.c.bf16 %v343, %v343
    %v361 = vpack.c.bf16 %v316, %v287
    %v362 = vpack.c.bf16 %v345, %v345
    %363 = vst [vmem:[#allocation8] sm:$0xff] %v347
    %364 = vst [vmem:[#allocation8 + $0x8] sm:$0xf] %v348
    %365 = vst [vmem:[#allocation8 + $0xc] sm:$0xff] %v349
    %366 = vst [vmem:[#allocation8 + $0x14] sm:$0xf] %v350
    %367 = vst [vmem:[#allocation8 + $0x18] sm:$0xff] %v351
    %368 = vst [vmem:[#allocation8 + $0x20] sm:$0xf] %v352
    %369 = vst [vmem:[#allocation8 + $0x24] sm:$0xff] %v353
    %370 = vst [vmem:[#allocation8 + $0x2c] sm:$0xf] %v354
    %371 = vst [vmem:[#allocation8 + $0x30] sm:$0xff] %v355
    %372 = vst [vmem:[#allocation8 + $0x38] sm:$0xf] %v356
    %373 = vst [vmem:[#allocation8 + $0x3c] sm:$0xff] %v357
    %374 = vst [vmem:[#allocation8 + $0x44] sm:$0xf] %v358
    %375 = vst [vmem:[#allocation8 + $0x48] sm:$0xff] %v359
    %376 = vst [vmem:[#allocation8 + $0x50] sm:$0xf] %v360
    %377 = vst [vmem:[#allocation8 + $0x54] sm:$0xff] %v361
    %378 = vst [vmem:[#allocation8 + $0x5c] sm:$0xf] %v362
    // Predicated region
    $region26: #{tpu_custom_call.1} parent=1 // pred_check
      _
    $region27: #{tpu_custom_call.1} parent=1 // pred_check_branch
      %380 = sbr.rel (0) target = $region29
    $region28: #{tpu_custom_call.1} parent=1 // pred_region
      %382 = vsyncadd [#allocation4], 0
      %s383 = sshll.u32 [#allocation8], 4
      %s384 = int_to_ptr.vmem [resolvable:$true] %s383
      %s385 = sshll.u32 %s3, 4
      %s386 = int_to_ptr.hbm [resolvable:$true] %s385
      %391 = dma.vmem_to_hbm [thread:$0]  %s384, 1536, %s386, [#allocation4], 192, 192, 12
    $region29: #{tpu_custom_call.1} parent=1 // pred_fallthru
      _
    // Predicated region
    $region30: #{tpu_custom_call.1} parent=1 // pred_check
      _
    $region31: #{tpu_custom_call.1} parent=1 // pred_check_branch
      %393 = sbr.rel (0) target = $region33
    $region32: #{tpu_custom_call.1} parent=1 // pred_region
      %395 = dma.done [#allocation4], 1536
    $region33: #{tpu_custom_call.1} parent=1 // pred_fallthru
      _
    %396 = vsyncpa [#allocation3], 1
    %397 = vsyncpa [#allocation6], 1
    %398 = vsyncpa [#allocation4], 1

</llo_original>
